<compile_context>
chip_gen: v7x
topology: tpu7x:2x2x1
jax: 0.10.0
libtpu: 0.0.40
codegen_flags: <defaults>
</compile_context>

<pallas_src>
import functools

import jax
import jax.numpy as jnp
from jax import lax
from jax.experimental import pallas as pl
from jax.experimental.pallas import tpu as pltpu

EPS = 1e-5


# --------------------------------------------------------------------------
# Fused kernel
# --------------------------------------------------------------------------
def _conv_bn_relu_kernel(x_ref, w_ref, gamma_ref, beta_ref, o_ref,
                         stat0, stat1, scale_ref, shift_ref,
                         *, inv_count, use_gram):
    p = pl.program_id(0)   # 0 = stats pass, 1 = normalize + write pass
    n = pl.program_id(1)   # batch index
    t = pl.program_id(2)   # spatial tile index

    @pl.when((p == 0) & (n == 0) & (t == 0))
    def _init():
        stat0[...] = jnp.zeros_like(stat0)
        stat1[...] = jnp.zeros_like(stat1)

    @pl.when(p == 0)
    def _stats():
        x = x_ref[...]                                              # (Cin, tm), native dtype
        if use_gram:
            # Cheaper than the W-matmul when Cin <= Cout: Cin^2 MACs/pixel instead of Cout*Cin.
            stat0[...] += jnp.sum(x.astype(jnp.float32), axis=1, keepdims=True)      # (Cin, 1)
            stat1[...] += lax.dot_general(x, x, (((1,), (1,)), ((), ())),
                                          preferred_element_type=jnp.float32)        # (Cin, Cin)
        else:
            y0 = jnp.dot(w_ref[...], x, preferred_element_type=jnp.float32)          # (Cout, tm)
            stat0[...] += jnp.sum(y0, axis=1, keepdims=True)                         # (Cout, 1)
            stat1[...] += jnp.sum(y0 * y0, axis=1, keepdims=True)                    # (Cout, 1)

    @pl.when(p == 1)
    def _normalize_and_write():
        # Hoisted BN epilogue: derive mean/var/scale/shift exactly once, on the first pass-1 step.
        @pl.when((n == 0) & (t == 0))
        def _finalize_stats():
            w32 = w_ref[...].astype(jnp.float32)
            if use_gram:
                mean = jnp.dot(w32, stat0[...], preferred_element_type=jnp.float32) * inv_count
                wg = jnp.dot(w32, stat1[...], preferred_element_type=jnp.float32)     # (Cout, Cin)
                ey2 = jnp.sum(wg * w32, axis=1, keepdims=True) * inv_count            # diag(W G W^T)/M
            else:
                mean = stat0[...] * inv_count
                ey2 = stat1[...] * inv_count
            # Biased variance (PyTorch BN normalization); clamp guards E[y^2]-mean^2 cancellation.
            # TODO(synk): switch to chunked/Welford-style centered partials for very large N*H*W.
            var = jnp.maximum(ey2 - mean * mean, 0.0)
            scale = gamma_ref[...] * lax.rsqrt(var + EPS)
            scale_ref[...] = scale
            shift_ref[...] = beta_ref[...] - mean * scale

        # channels-major 1x1 conv: (Cout,Cin)@(Cin,tm) -> (Cout,tm); lanes = spatial axis.
        y = jnp.dot(w_ref[...], x_ref[...], preferred_element_type=jnp.float32)
        o_ref[...] = jnp.maximum(y * scale_ref[...] + shift_ref[...], 0.0).astype(o_ref.dtype)


# --------------------------------------------------------------------------
# Spatial tile picker: lane-dense (multiple of 128), bounded VMEM working set,
# bounded zero-pad waste.
# --------------------------------------------------------------------------
def _pick_spatial_tile(hw, cin, cout, x_itemsize, out_itemsize):
    hw128 = max(128, pl.cdiv(hw, 128) * 128)
    budget = 40 * 2**20   # double-buffered x + out tiles must stay well under v7x's 64 MiB VMEM
    for cand in (4096, 2048, 1024, 512, 256, 128):
        if cand > hw128:
            continue
        padded = pl.cdiv(hw, cand) * cand
        waste = (padded - hw) / hw
        working = cand * (2 * cin * x_itemsize + 2 * cout * out_itemsize)
        if working <= budget and (waste <= 0.15 or cand == 128):
            return cand
    return 128


# --------------------------------------------------------------------------
# Wrapper (NCHW in / NCHW out, matching the PyTorch module)
# --------------------------------------------------------------------------
def conv_block_forward(x_nchw, w, b, gamma, beta, *, k=1, s=1, tm=None):
    # TODO(synk): only the module-default k=1, s=1 (pointwise conv) path is implemented; general
    # k/s would need an im2col / window-gather stage feeding the same channels-major matmul kernel.
    assert k == 1 and s == 1
    # Train-mode BN subtracts the batch mean, which absorbs a constant per-channel conv bias
    # exactly -> identical forward output.  (Eval-mode/running-stats BN would need the bias.)
    del b

    N, Cin, H, W_sp = x_nchw.shape
    Cout = w.shape[0]
    HW = H * W_sp
    out_dtype = x_nchw.dtype

    x3 = x_nchw.reshape(N, Cin, HW)                       # native dtype, free reshape, no upcast
    w_mat = w.reshape(Cout, Cin)                          # native dtype (bf16 stays bf16)
    gamma_col = gamma.reshape(Cout, 1).astype(jnp.float32)
    beta_col = beta.reshape(Cout, 1).astype(jnp.float32)

    x_item = x3.dtype.itemsize
    o_item = jnp.dtype(out_dtype).itemsize
    if tm is None:
        tm = _pick_spatial_tile(HW, Cin, Cout, x_item, o_item)
    assert tm % 128 == 0

    HW_pad = pl.cdiv(HW, tm) * tm
    if HW_pad != HW:
        # Zero columns contribute nothing to sum / Gram / y, and inv_count uses the TRUE count,
        # so batch stats stay exact; the pad is sliced off after the call.
        # TODO(synk): an in-kernel lane mask on the tail tile would avoid materializing the pad.
        x3 = jnp.pad(x3, ((0, 0), (0, 0), (0, HW_pad - HW)))
    T = HW_pad // tm

    use_gram = Cin <= Cout          # Gram stats cheaper iff Cin <= Cout (per perf review)
    inv_count = 1.0 / float(N * HW)

    if use_gram:
        stat_shapes = [pltpu.VMEM((Cin, 1), jnp.float32),      # sum_x
                       pltpu.VMEM((Cin, Cin), jnp.float32)]    # Gram = sum x x^T
    else:
        stat_shapes = [pltpu.VMEM((Cout, 1), jnp.float32),     # sum_y
                       pltpu.VMEM((Cout, 1), jnp.float32)]     # sum_y^2

    w_item = w_mat.dtype.itemsize
    est = (2 * Cin * tm * x_item + 2 * Cout * tm * o_item + 2 * Cout * Cin * w_item
           + 8 * Cout * 4 + (Cin * Cin + Cin) * 4)
    vmem_limit = int(min(48 * 2**20, max(8 * 2**20, 2 * est)))   # <= 48 MiB: safe on v7x's 64 MiB

    out3 = pl.pallas_call(
        functools.partial(_conv_bn_relu_kernel, inv_count=inv_count, use_gram=use_gram),
        out_shape=jax.ShapeDtypeStruct((N, Cout, HW_pad), out_dtype),
        grid_spec=pltpu.PrefetchScalarGridSpec(
            num_scalar_prefetch=0,
            grid=(2, N, T),
            in_specs=[
                # TODO(synk): pipeline_mode=pl.Buffered(1) on the resident weight/gamma/beta and
                # Buffered(3) on x (small-Cin case) would trim VMEM / hide DMA latency further.
                pl.BlockSpec((None, Cin, tm), lambda p, n, t: (n, 0, t)),   # x tile (both passes)
                pl.BlockSpec((Cout, Cin), lambda p, n, t: (0, 0)),          # weight (resident)
                pl.BlockSpec((Cout, 1), lambda p, n, t: (0, 0)),            # gamma  (resident)
                pl.BlockSpec((Cout, 1), lambda p, n, t: (0, 0)),            # beta   (resident)
            ],
            # Pass 0 pins the (never written) output block to (0,0,0) so nothing is flushed to
            # HBM during the stats pass; pass 1 writes every block exactly once.
            out_specs=pl.BlockSpec((None, Cout, tm), lambda p, n, t: (n * p, 0, t * p)),
            scratch_shapes=stat_shapes + [
                pltpu.VMEM((Cout, 1), jnp.float32),   # hoisted BN scale
                pltpu.VMEM((Cout, 1), jnp.float32),   # hoisted BN shift
            ],
        ),
        compiler_params=pltpu.CompilerParams(
            # Stats accumulate across all three grid axes -> keep them sequential (the pinned
            # pass-0 output block also requires it).
            # TODO(synk): for v7x dual-TC, emit per-core partial sums (scratch (num_cores, ...))
            # so the N / T axes can be marked "parallel" and both TensorCores stream.
            dimension_semantics=("arbitrary", "arbitrary", "arbitrary"),
            vmem_limit_bytes=vmem_limit,
        ),
    )(x3, w_mat, gamma_col, beta_col)

    if HW_pad != HW:
        out3 = out3[:, :, :HW]
    return out3.reshape(N, Cout, H, W_sp)


# --------------------------------------------------------------------------
# Pure-JAX reference (true PyTorch semantics, including the conv bias)
# --------------------------------------------------------------------------
def conv_block_ref(x_nchw, w, b, gamma, beta):
    Cout, Cin = w.shape[0], w.shape[1]
    xf = x_nchw.astype(jnp.float32)
    wf = w.reshape(Cout, Cin).astype(jnp.float32)
    y = jnp.einsum("nchw,oc->nohw", xf, wf) + b.astype(jnp.float32)[None, :, None, None]
    mean = jnp.mean(y, axis=(0, 2, 3), keepdims=True)
    var = jnp.mean((y - mean) ** 2, axis=(0, 2, 3), keepdims=True)
    yn = (y - mean) / jnp.sqrt(var + EPS)
    yn = yn * gamma.astype(jnp.float32)[None, :, None, None] \
         + beta.astype(jnp.float32)[None, :, None, None]
    return jnp.maximum(yn, 0.0)


if __name__ == "__main__":
    key = jax.random.PRNGKey(0)
    cases = [
        # (N, Cin, Cout, H, W, dtype, tol)
        (2, 4, 8, 16, 16, jnp.float32, 1e-3),    # Gram-stats path, no padding
        (2, 8, 4, 7, 7, jnp.float32, 1e-3),      # direct-stats path + zero-pad (HW=49 -> 128)
        (2, 4, 8, 16, 16, jnp.bfloat16, 5e-2),   # native-bf16 path, bf16 output
    ]
    for i, (N, Cin, Cout, H, W_sp, dtype, tol) in enumerate(cases):
        key, kx, kw, kb = jax.random.split(key, 4)
        x = jax.random.normal(kx, (N, Cin, H, W_sp), dtype=jnp.float32).astype(dtype)
        bound = 1.0 / (Cin ** 0.5)
        w = jax.random.uniform(kw, (Cout, Cin, 1, 1), minval=-bound, maxval=bound,
                               dtype=jnp.float32).astype(dtype)
        b = jax.random.uniform(kb, (Cout,), minval=-bound, maxval=bound, dtype=jnp.float32)
        gamma = jnp.linspace(0.5, 1.5, Cout, dtype=jnp.float32)
        beta = jnp.linspace(-0.2, 0.2, Cout, dtype=jnp.float32)

        out = jax.block_until_ready(conv_block_forward(x, w, b, gamma, beta, k=1, s=1))
        ref = conv_block_ref(x, w, b, gamma, beta)

        assert out.shape == (N, Cout, H, W_sp), f"case {i}: bad shape {out.shape}"
        assert out.dtype == dtype, f"case {i}: bad dtype {out.dtype}"
        assert jnp.allclose(out.astype(jnp.float32), ref, atol=tol, rtol=tol), \
            f"case {i}: max err {jnp.max(jnp.abs(out.astype(jnp.float32) - ref))}"

    print("KERNEL_OK")
</pallas_src>

<mosaic_0001>
module attributes {stable_mosaic.version = 11 : i64} {
  func.func @_conv_bn_relu_kernel(%arg0: i32, %arg1: i32, %arg2: i32, %arg3: memref<1x4x256xf32, #tpu.memory_space<vmem>>, %arg4: memref<8x4xf32, #tpu.memory_space<vmem>>, %arg5: memref<8x1xf32, #tpu.memory_space<vmem>>, %arg6: memref<8x1xf32, #tpu.memory_space<vmem>>, %arg7: memref<1x8x256xf32, #tpu.memory_space<vmem>>, %arg8: memref<4x1xf32, #tpu.memory_space<vmem>>, %arg9: memref<4x4xf32, #tpu.memory_space<vmem>>, %arg10: memref<8x1xf32, #tpu.memory_space<vmem>>, %arg11: memref<8x1xf32, #tpu.memory_space<vmem>>) attributes {dimension_semantics = [#tpu.dimension_semantics<arbitrary>, #tpu.dimension_semantics<arbitrary>, #tpu.dimension_semantics<arbitrary>], iteration_bounds = array<i64: 2, 2, 1>, scalar_prefetch = 0 : i64, scratch_operands = 4 : i64, tpu.core_type = #tpu.core_type<tc>, window_params = [{transform_indices = @transform_0, window_bounds = array<i64: 1, 4, 256>}, {pipeline_mode = #tpu.pipeline_mode<synchronous>, transform_indices = @transform_1, window_bounds = array<i64: 8, 4>}, {pipeline_mode = #tpu.pipeline_mode<synchronous>, transform_indices = @transform_2, window_bounds = array<i64: 8, 1>}, {pipeline_mode = #tpu.pipeline_mode<synchronous>, transform_indices = @transform_3, window_bounds = array<i64: 8, 1>}, {transform_indices = @transform_4, window_bounds = array<i64: 1, 8, 256>}]} {
    %c0_i32 = arith.constant 0 : i32
    %0 = arith.cmpi eq, %arg0, %c0_i32 : i32
    %c0_i32_0 = arith.constant 0 : i32
    %1 = arith.cmpi eq, %arg1, %c0_i32_0 : i32
    %2 = arith.andi %0, %1 : i1
    %c0_i32_1 = arith.constant 0 : i32
    %3 = arith.cmpi eq, %arg2, %c0_i32_1 : i32
    %4 = arith.andi %2, %3 : i1
    %5 = arith.extui %4 : i1 to i32
    %c0_i32_2 = arith.constant 0 : i32
    %6 = arith.cmpi ne, %5, %c0_i32_2 : i32
    scf.if %6 {
      %cst = arith.constant 0.000000e+00 : f32
      %13 = vector.broadcast %cst : f32 to vector<4x1xf32>
      %c0 = arith.constant 0 : index
      %c0_6 = arith.constant 0 : index
      %14 = vector.load %arg8[%c0, %c0_6] : memref<4x1xf32, #tpu.memory_space<vmem>>, vector<4x1xf32>
      tpu.vector_store %arg8[%c0, %c0_6], %13 {strides = array<i32>} : memref<4x1xf32, #tpu.memory_space<vmem>>, vector<4x1xf32>,
      %cst_7 = arith.constant 0.000000e+00 : f32
      %15 = vector.broadcast %cst_7 : f32 to vector<4x4xf32>
      %c0_8 = arith.constant 0 : index
      %c0_9 = arith.constant 0 : index
      %16 = vector.load %arg9[%c0_8, %c0_9] : memref<4x4xf32, #tpu.memory_space<vmem>>, vector<4x4xf32>
      tpu.vector_store %arg9[%c0_8, %c0_9], %15 {strides = array<i32>} : memref<4x4xf32, #tpu.memory_space<vmem>>, vector<4x4xf32>,
    } else {
    }
    %c0_i32_3 = arith.constant 0 : i32
    %7 = arith.cmpi eq, %arg0, %c0_i32_3 : i32
    %8 = arith.extui %7 : i1 to i32
    %c0_i32_4 = arith.constant 0 : i32
    %9 = arith.cmpi ne, %8, %c0_i32_4 : i32
    scf.if %9 {
      %c0 = arith.constant 0 : index
      %c0_6 = arith.constant 0 : index
      %c0_7 = arith.constant 0 : index
      %13 = vector.load %arg3[%c0, %c0_6, %c0_7] : memref<1x4x256xf32, #tpu.memory_space<vmem>>, vector<1x4x256xf32>
      %14 = vector.shape_cast %13 : vector<1x4x256xf32> to vector<4x256xf32>
      %c0_8 = arith.constant 0 : index
      %c0_9 = arith.constant 0 : index
      %15 = vector.load %arg8[%c0_8, %c0_9] : memref<4x1xf32, #tpu.memory_space<vmem>>, vector<4x1xf32>
      %cst = arith.constant dense<0.000000e+00> : vector<4xf32>
      %16 = vector.multi_reduction <add>, %14, %cst [1] : vector<4x256xf32> to vector<4xf32>
      %17 = vector.shape_cast %16 : vector<4xf32> to vector<4x1xf32>
      %18 = arith.addf %15, %17 : vector<4x1xf32>
      %c0_10 = arith.constant 0 : index
      %c0_11 = arith.constant 0 : index
      %19 = vector.load %arg8[%c0_10, %c0_11] : memref<4x1xf32, #tpu.memory_space<vmem>>, vector<4x1xf32>
      tpu.vector_store %arg8[%c0_10, %c0_11], %18 {strides = array<i32>} : memref<4x1xf32, #tpu.memory_space<vmem>>, vector<4x1xf32>,
      %c0_12 = arith.constant 0 : index
      %c0_13 = arith.constant 0 : index
      %20 = vector.load %arg9[%c0_12, %c0_13] : memref<4x4xf32, #tpu.memory_space<vmem>>, vector<4x4xf32>
      %cst_14 = arith.constant dense<0.000000e+00> : vector<4x4xf32>
      %21 = tpu.matmul %14, %14, %cst_14 {dimension_numbers = #tpu.dot_dimension_numbers<[1], [1], [0], [0], [0, 0, 1, 0], [], []>} : vector<4x256xf32>, vector<4x256xf32>, vector<4x4xf32> -> vector<4x4xf32>
      %22 = arith.addf %20, %21 : vector<4x4xf32>
      %c0_15 = arith.constant 0 : index
      %c0_16 = arith.constant 0 : index
      %23 = vector.load %arg9[%c0_15, %c0_16] : memref<4x4xf32, #tpu.memory_space<vmem>>, vector<4x4xf32>
      tpu.vector_store %arg9[%c0_15, %c0_16], %22 {strides = array<i32>} : memref<4x4xf32, #tpu.memory_space<vmem>>, vector<4x4xf32>,
    } else {
    }
    %c1_i32 = arith.constant 1 : i32
    %10 = arith.cmpi eq, %arg0, %c1_i32 : i32
    %11 = arith.extui %10 : i1 to i32
    %c0_i32_5 = arith.constant 0 : i32
    %12 = arith.cmpi ne, %11, %c0_i32_5 : i32
    scf.if %12 {
      %c0_i32_6 = arith.constant 0 : i32
      %13 = arith.cmpi eq, %arg1, %c0_i32_6 : i32
      %c0_i32_7 = arith.constant 0 : i32
      %14 = arith.cmpi eq, %arg2, %c0_i32_7 : i32
      %15 = arith.andi %13, %14 : i1
      %16 = arith.extui %15 : i1 to i32
      %c0_i32_8 = arith.constant 0 : i32
      %17 = arith.cmpi ne, %16, %c0_i32_8 : i32
      scf.if %17 {
        %c0_21 = arith.constant 0 : index
        %c0_22 = arith.constant 0 : index
        %33 = vector.load %arg4[%c0_21, %c0_22] : memref<8x4xf32, #tpu.memory_space<vmem>>, vector<8x4xf32>
        %c0_23 = arith.constant 0 : index
        %c0_24 = arith.constant 0 : index
        %34 = vector.load %arg8[%c0_23, %c0_24] : memref<4x1xf32, #tpu.memory_space<vmem>>, vector<4x1xf32>
        %cst_25 = arith.constant dense<0.000000e+00> : vector<8x1xf32>
        %35 = tpu.matmul %33, %34, %cst_25 {dimension_numbers = #tpu.dot_dimension_numbers<[1], [0], [0], [1], [0, 0, 1, 1], [], []>} : vector<8x4xf32>, vector<4x1xf32>, vector<8x1xf32> -> vector<8x1xf32>
        %cst_26 = arith.constant 0.001953125 : f32
        %36 = vector.broadcast %cst_26 : f32 to vector<8x1xf32>
        %37 = arith.mulf %35, %36 : vector<8x1xf32>
        %c0_27 = arith.constant 0 : index
        %c0_28 = arith.constant 0 : index
        %38 = vector.load %arg9[%c0_27, %c0_28] : memref<4x4xf32, #tpu.memory_space<vmem>>, vector<4x4xf32>
        %cst_29 = arith.constant dense<0.000000e+00> : vector<8x4xf32>
        %39 = tpu.matmul %33, %38, %cst_29 {dimension_numbers = #tpu.dot_dimension_numbers<[1], [0], [0], [1], [0, 0, 1, 1], [], []>} : vector<8x4xf32>, vector<4x4xf32>, vector<8x4xf32> -> vector<8x4xf32>
        %40 = arith.mulf %39, %33 : vector<8x4xf32>
        %cst_30 = arith.constant dense<0.000000e+00> : vector<8xf32>
        %41 = vector.multi_reduction <add>, %40, %cst_30 [1] : vector<8x4xf32> to vector<8xf32>
        %42 = vector.shape_cast %41 : vector<8xf32> to vector<8x1xf32>
        %cst_31 = arith.constant 0.001953125 : f32
        %43 = vector.broadcast %cst_31 : f32 to vector<8x1xf32>
        %44 = arith.mulf %42, %43 : vector<8x1xf32>
        %45 = arith.mulf %37, %37 : vector<8x1xf32>
        %46 = arith.subf %44, %45 : vector<8x1xf32>
        %cst_32 = arith.constant 0.000000e+00 : f32
        %47 = vector.broadcast %cst_32 : f32 to vector<8x1xf32>
        %48 = arith.maximumf %46, %47 : vector<8x1xf32>
        %c0_33 = arith.constant 0 : index
        %c0_34 = arith.constant 0 : index
        %49 = vector.load %arg5[%c0_33, %c0_34] : memref<8x1xf32, #tpu.memory_space<vmem>>, vector<8x1xf32>
        %cst_35 = arith.constant 9.99999974E-6 : f32
        %50 = vector.broadcast %cst_35 : f32 to vector<8x1xf32>
        %51 = arith.addf %48, %50 : vector<8x1xf32>
        %52 = math.rsqrt %51 : vector<8x1xf32>
        %53 = arith.mulf %49, %52 : vector<8x1xf32>
        %c0_36 = arith.constant 0 : index
        %c0_37 = arith.constant 0 : index
        %54 = vector.load %arg10[%c0_36, %c0_37] : memref<8x1xf32, #tpu.memory_space<vmem>>, vector<8x1xf32>
        tpu.vector_store %arg10[%c0_36, %c0_37], %53 {strides = array<i32>} : memref<8x1xf32, #tpu.memory_space<vmem>>, vector<8x1xf32>,
        %c0_38 = arith.constant 0 : index
        %c0_39 = arith.constant 0 : index
        %55 = vector.load %arg6[%c0_38, %c0_39] : memref<8x1xf32, #tpu.memory_space<vmem>>, vector<8x1xf32>
        %56 = arith.mulf %37, %53 : vector<8x1xf32>
        %57 = arith.subf %55, %56 : vector<8x1xf32>
        %c0_40 = arith.constant 0 : index
        %c0_41 = arith.constant 0 : index
        %58 = vector.load %arg11[%c0_40, %c0_41] : memref<8x1xf32, #tpu.memory_space<vmem>>, vector<8x1xf32>
        tpu.vector_store %arg11[%c0_40, %c0_41], %57 {strides = array<i32>} : memref<8x1xf32, #tpu.memory_space<vmem>>, vector<8x1xf32>,
      } else {
      }
      %c0 = arith.constant 0 : index
      %c0_9 = arith.constant 0 : index
      %18 = vector.load %arg4[%c0, %c0_9] : memref<8x4xf32, #tpu.memory_space<vmem>>, vector<8x4xf32>
      %c0_10 = arith.constant 0 : index
      %c0_11 = arith.constant 0 : index
      %c0_12 = arith.constant 0 : index
      %19 = vector.load %arg3[%c0_10, %c0_11, %c0_12] : memref<1x4x256xf32, #tpu.memory_space<vmem>>, vector<1x4x256xf32>
      %20 = vector.shape_cast %19 : vector<1x4x256xf32> to vector<4x256xf32>
      %cst = arith.constant dense<0.000000e+00> : vector<8x256xf32>
      %21 = tpu.matmul %18, %20, %cst {dimension_numbers = #tpu.dot_dimension_numbers<[1], [0], [0], [1], [0, 0, 1, 1], [], []>} : vector<8x4xf32>, vector<4x256xf32>, vector<8x256xf32> -> vector<8x256xf32>
      %c0_13 = arith.constant 0 : index
      %c0_14 = arith.constant 0 : index
      %22 = vector.load %arg10[%c0_13, %c0_14] : memref<8x1xf32, #tpu.memory_space<vmem>>, vector<8x1xf32>
      %23 = vector.broadcast %22 : vector<8x1xf32> to vector<8x256xf32>
      %24 = arith.mulf %21, %23 : vector<8x256xf32>
      %c0_15 = arith.constant 0 : index
      %c0_16 = arith.constant 0 : index
      %25 = vector.load %arg11[%c0_15, %c0_16] : memref<8x1xf32, #tpu.memory_space<vmem>>, vector<8x1xf32>
      %26 = vector.broadcast %25 : vector<8x1xf32> to vector<8x256xf32>
      %27 = arith.addf %24, %26 : vector<8x256xf32>
      %cst_17 = arith.constant 0.000000e+00 : f32
      %28 = vector.broadcast %cst_17 : f32 to vector<8x256xf32>
      %29 = arith.maximumf %27, %28 : vector<8x256xf32>
      %c0_18 = arith.constant 0 : index
      %c0_19 = arith.constant 0 : index
      %c0_20 = arith.constant 0 : index
      %30 = vector.load %arg7[%c0_18, %c0_19, %c0_20] : memref<1x8x256xf32, #tpu.memory_space<vmem>>, vector<1x8x256xf32>
      %31 = vector.shape_cast %30 : vector<1x8x256xf32> to vector<8x256xf32>
      %32 = vector.shape_cast %29 : vector<8x256xf32> to vector<1x8x256xf32>
      tpu.vector_store %arg7[%c0_18, %c0_19, %c0_20], %32 {strides = array<i32>} : memref<1x8x256xf32, #tpu.memory_space<vmem>>, vector<1x8x256xf32>,
    } else {
    }
    return
  }
  func.func @transform_0(%arg0: i32, %arg1: i32, %arg2: i32) -> (i32, i32, i32) {
    %c0_i32 = arith.constant 0 : i32
    %c0_i32_0 = arith.constant 0 : i32
    return %arg1, %c0_i32, %arg2 : i32, i32, i32
  }
  func.func @transform_1(%arg0: i32, %arg1: i32, %arg2: i32) -> (i32, i32) {
    %c0_i32 = arith.constant 0 : i32
    %c0_i32_0 = arith.constant 0 : i32
    %c0_i32_1 = arith.constant 0 : i32
    return %c0_i32, %c0_i32_0 : i32, i32
  }
  func.func @transform_2(%arg0: i32, %arg1: i32, %arg2: i32) -> (i32, i32) {
    %c0_i32 = arith.constant 0 : i32
    %c0_i32_0 = arith.constant 0 : i32
    %c0_i32_1 = arith.constant 0 : i32
    return %c0_i32, %c0_i32_0 : i32, i32
  }
  func.func @transform_3(%arg0: i32, %arg1: i32, %arg2: i32) -> (i32, i32) {
    %c0_i32 = arith.constant 0 : i32
    %c0_i32_0 = arith.constant 0 : i32
    %c0_i32_1 = arith.constant 0 : i32
    return %c0_i32, %c0_i32_0 : i32, i32
  }
  func.func @transform_4(%arg0: i32, %arg1: i32, %arg2: i32) -> (i32, i32, i32) {
    %0 = arith.muli %arg1, %arg0 : i32
    %1 = arith.muli %arg2, %arg0 : i32
    %c0_i32 = arith.constant 0 : i32
    %c0_i32_0 = arith.constant 0 : i32
    return %0, %c0_i32, %1 : i32, i32, i32
  }
}

</mosaic_0001>

<llo_original>
// kernel: tpu_custom_call.1
$region0: #{tpu_custom_call.1}
  #allocation0 [shape = 'u32[]', space=smem, size = 0x4, offset = 0x4, fixed_abs, tag = 'smem constant byte address 0x4 - core index']
  #allocation1 [shape = 'u32[144,128]{1,0:T(1,128)}', space=vmem, size = 0x12000, scoped, tag = 'internal scratch']
  #allocation2 [shape = 'f32[4,1]{1,0:T(4,128)}', space=vmem, size = 0x800, scoped, tag = 'scratch operand']
  #allocation3 [shape = 'f32[4,4]{1,0:T(4,128)}', space=vmem, size = 0x800, scoped, tag = 'scratch operand']
  #allocation4 [shape = 'f32[8,1]{1,0:T(8,128)}', space=vmem, size = 0x1000, scoped, tag = 'scratch operand']
  #allocation5 [shape = 'f32[8,1]{1,0:T(8,128)}', space=vmem, size = 0x1000, scoped, tag = 'scratch operand']
  %s0 = inlined_call_operand.vmem [shape: f32[2,4,256], index: 0, kind: input, shape index: {}]
  %s1 = inlined_call_operand.vmem [shape: f32[8,4], index: 1, kind: input, shape index: {}]
  %s2 = inlined_call_operand.vmem [shape: f32[8,1], index: 2, kind: input, shape index: {}]
  %s3 = inlined_call_operand.vmem [shape: f32[8,1], index: 3, kind: input, shape index: {}]
  %s4 = inlined_call_operand.hbm [shape: f32[2,8,256], index: 4, kind: output, shape index: {}]
  %s5 = sld [smem:[#allocation0]]
  $region65: #{tpu_custom_call.1} parent=0
    _
  %s7 = ssub.s32 1, %s5
  %s8 = scalar_select 0, %s7, %s5
  $region1: #{tpu_custom_call.1} parent=0
    #allocation6 [shape = 'u8[16384]{0}', space=vmem, size = 0x4000, scoped, tag = 'output window, operand 0']
    #allocation7 [shape = 's32[2]{0}', space=sflag, size = 0x8, scoped, tag = 'scoped memory for tpu_custom_call.1']
    %9 = vsyncpa [#allocation7], 0
    %s10 = scalar_lea.sflag [#allocation7], 1
    %11 = vsyncpa %s10, 0
    loop: start=0, step=1, limit=6
    $region2: #{tpu_custom_call.1} parent=1 // loop_pre_header
      _
    $region3: #{tpu_custom_call.1} parent=1 // loop_header
      %s13 = sphi 0, %s17
      %p14 = scmp.ge.s32.totalorder %s13, 6
      %s20 = sphi 0, %s39
      %s21 = sphi 0, %s35
      %s22 = sphi 0, %s31
      %s23 = sphi 0, %s20
      %s24 = sphi 0, %s21
      %s25 = sphi 0, %s22
      %s26 = sphi 0, %s23
      %s27 = sphi 0, %s24
      %s28 = sphi 0, %s25
      %s44 = sphi 0, %s46
      %s47 = sphi 0, %s44
      %s48 = sphi 0, %s47
      %s64 = sphi 0, %s48
      %s68 = sphi 0, %s68
      %s70 = sphi 0, %s68
      %s71 = sphi 0, %s70
      %s85 = sphi 0, %s71
      %s89 = sphi 0, %s89
      %s91 = sphi 0, %s89
      %s92 = sphi 0, %s91
      %s106 = sphi 0, %s92
      %s110 = sphi 0, %s110
      %s112 = sphi 0, %s110
      %s113 = sphi 0, %s112
      %s127 = sphi 0, %s113
      %s139 = sphi 0, %s141
      %s142 = sphi 0, %s139
      %s143 = sphi 0, %s142
      %s159 = sphi 0, %s143
    $region4: #{tpu_custom_call.1} parent=1 // loop_header_branch
      %16 = sbr.rel (%p14) target = $region8
    $region5: #{tpu_custom_call.1} parent=1 // loop_body
      %s18 = ssub.s32 %s13, 1
      %s19 = ssub.s32 %s13, 2
      %s29 = sadd.s32 1, %s22
      %p30 = scmp.ge.s32.totalorder %s29, 1
      %s31 = scalar_select %p30, 0, %s29
      %s32 = sadd.s32 1, %s21
      %s33 = scalar_select %p30, %s32, %s21
      %p34 = scmp.ge.s32.totalorder %s33, 2
      %s35 = scalar_select %p34, 0, %s33
      %s36 = sadd.s32 1, %s20
      %s37 = scalar_select %p34, %s36, %s20
      %p38 = scmp.ge.s32.totalorder %s37, 2
      %s39 = scalar_select %p38, 0, %s37
      %s40 = ssub.s32 %s21, %s35
      %s41 = ssub.s32 %s22, %s31
      %s42 = sor.u32 %s40, %s41
      %p43 = scmp.eq.s32.totalorder %s42, 0
      %s45 = sadd.s32 %s44, 1
      %s46 = scalar_select %p43, %s44, %s45
      %p49 = pneg %p43
      %p50 = scmp.eq.s32.totalorder %s13, 3
      %p51 = por %p49, %p50
      %p52 = scmp.ne.s32.totalorder %s44, %s47
      %p53 = scmp.eq.s32.totalorder %s13, 0
      %p54 = por %p52, %p53
      %p55 = scmp.ne.s32.totalorder %s44, %s47
      %p56 = scmp.eq.s32.totalorder %s18, 3
      %p57 = por %p55, %p56
      %p58 = scmp.ne.s32.totalorder %s47, %s48
      %p59 = scmp.eq.s32.totalorder %s18, 0
      %p60 = por %p58, %p59
      %p61 = scmp.ne.s32.totalorder %s47, %s48
      %p62 = scmp.eq.s32.totalorder %s19, 3
      %p63 = por %p61, %p62
      %p65 = scmp.ne.s32.totalorder %s48, %s64
      %p66 = scmp.eq.s32.totalorder %s19, 0
      %p67 = por %p65, %p66
      %s69 = sadd.s32 %s68, 1
      %p72 = scmp.eq.s32.totalorder %s13, 3
      %p73 = scmp.ne.s32.totalorder %s68, %s70
      %p74 = scmp.eq.s32.totalorder %s13, 0
      %p75 = por %p73, %p74
      %p76 = scmp.ne.s32.totalorder %s68, %s70
      %p77 = scmp.eq.s32.totalorder %s18, 3
      %p78 = por %p76, %p77
      %p79 = scmp.ne.s32.totalorder %s70, %s71
      %p80 = scmp.eq.s32.totalorder %s18, 0
      %p81 = por %p79, %p80
      %p82 = scmp.ne.s32.totalorder %s70, %s71
      %p83 = scmp.eq.s32.totalorder %s19, 3
      %p84 = por %p82, %p83
      %p86 = scmp.ne.s32.totalorder %s71, %s85
      %p87 = scmp.eq.s32.totalorder %s19, 0
      %p88 = por %p86, %p87
      %s90 = sadd.s32 %s89, 1
      %p93 = scmp.eq.s32.totalorder %s13, 3
      %p94 = scmp.ne.s32.totalorder %s89, %s91
      %p95 = scmp.eq.s32.totalorder %s13, 0
      %p96 = por %p94, %p95
      %p97 = scmp.ne.s32.totalorder %s89, %s91
      %p98 = scmp.eq.s32.totalorder %s18, 3
      %p99 = por %p97, %p98
      %p100 = scmp.ne.s32.totalorder %s91, %s92
      %p101 = scmp.eq.s32.totalorder %s18, 0
      %p102 = por %p100, %p101
      %p103 = scmp.ne.s32.totalorder %s91, %s92
      %p104 = scmp.eq.s32.totalorder %s19, 3
      %p105 = por %p103, %p104
      %p107 = scmp.ne.s32.totalorder %s92, %s106
      %p108 = scmp.eq.s32.totalorder %s19, 0
      %p109 = por %p107, %p108
      %s111 = sadd.s32 %s110, 1
      %p114 = scmp.eq.s32.totalorder %s13, 3
      %p115 = scmp.ne.s32.totalorder %s110, %s112
      %p116 = scmp.eq.s32.totalorder %s13, 0
      %p117 = por %p115, %p116
      %p118 = scmp.ne.s32.totalorder %s110, %s112
      %p119 = scmp.eq.s32.totalorder %s18, 3
      %p120 = por %p118, %p119
      %p121 = scmp.ne.s32.totalorder %s112, %s113
      %p122 = scmp.eq.s32.totalorder %s18, 0
      %p123 = por %p121, %p122
      %p124 = scmp.ne.s32.totalorder %s112, %s113
      %p125 = scmp.eq.s32.totalorder %s19, 3
      %p126 = por %p124, %p125
      %p128 = scmp.ne.s32.totalorder %s113, %s127
      %p129 = scmp.eq.s32.totalorder %s19, 0
      %p130 = por %p128, %p129
      %s131 = smul.u32 %s21, %s20
      %s132 = smul.u32 %s22, %s20
      %s133 = smul.u32 %s35, %s39
      %s134 = smul.u32 %s31, %s39
      %s135 = ssub.s32 %s131, %s133
      %s136 = ssub.s32 %s132, %s134
      %s137 = sor.u32 %s135, %s136
      %p138 = scmp.eq.s32.totalorder %s137, 0
      %s140 = sadd.s32 %s139, 1
      %s141 = scalar_select %p138, %s139, %s140
      %p144 = pneg %p138
      %p145 = scmp.eq.s32.totalorder %s13, 3
      %p146 = por %p144, %p145
      %p147 = scmp.ne.s32.totalorder %s139, %s142
      %p148 = scmp.eq.s32.totalorder %s13, 0
      %p149 = por %p147, %p148
      %p150 = scmp.ne.s32.totalorder %s139, %s142
      %p151 = scmp.eq.s32.totalorder %s18, 3
      %p152 = por %p150, %p151
      %p153 = scmp.ne.s32.totalorder %s142, %s143
      %p154 = scmp.eq.s32.totalorder %s18, 0
      %p155 = por %p153, %p154
      %p156 = scmp.ne.s32.totalorder %s142, %s143
      %p157 = scmp.eq.s32.totalorder %s19, 3
      %p158 = por %p156, %p157
      %p160 = scmp.ne.s32.totalorder %s143, %s159
      %p161 = scmp.eq.s32.totalorder %s19, 0
      %p162 = por %p160, %p161
      %p163 = scmp.le.s32.totalorder 1, %s13
      %p164 = scmp.lt.s32.totalorder %s13, 5
      %p165 = pnand %p163, %p164
      %p166 = pneg %p165
      // Predicated region
      $region9: #{tpu_custom_call.1} parent=5 // pred_check
        _
      $region10: #{tpu_custom_call.1} parent=5 // pred_check_branch
        %168 = sbr.rel (%p165) target = $region12
      $region11: #{tpu_custom_call.1} parent=5 // pred_region
        %s169 = ssub.s32 %s13, 1
        // Predicated region
        $region13: #{tpu_custom_call.1} parent=11 // pred_check
          %p170 = pneg %p81
        $region14: #{tpu_custom_call.1} parent=11 // pred_check_branch
          %172 = sbr.rel (%p170) target = $region16
        $region15: #{tpu_custom_call.1} parent=11 // pred_region
          _
        $region16: #{tpu_custom_call.1} parent=11 // pred_fallthru
          _
        // Predicated region
        $region17: #{tpu_custom_call.1} parent=11 // pred_check
          %p173 = pneg %p102
        $region18: #{tpu_custom_call.1} parent=11 // pred_check_branch
          %175 = sbr.rel (%p173) target = $region20
        $region19: #{tpu_custom_call.1} parent=11 // pred_region
          _
        $region20: #{tpu_custom_call.1} parent=11 // pred_fallthru
          _
        // Predicated region
        $region21: #{tpu_custom_call.1} parent=11 // pred_check
          %p176 = pneg %p123
        $region22: #{tpu_custom_call.1} parent=11 // pred_check_branch
          %178 = sbr.rel (%p176) target = $region24
        $region23: #{tpu_custom_call.1} parent=11 // pred_region
          _
        $region24: #{tpu_custom_call.1} parent=11 // pred_fallthru
          _
      $region12: #{tpu_custom_call.1} parent=5 // pred_fallthru
        _
      %p179 = scmp.lt.s32.totalorder %s13, 4
      // Predicated region
      $region25: #{tpu_custom_call.1} parent=5 // pred_check
        %p180 = pneg %p179
      $region26: #{tpu_custom_call.1} parent=5 // pred_check_branch
        %182 = sbr.rel (%p180) target = $region28
      $region27: #{tpu_custom_call.1} parent=5 // pred_region
        // Predicated region
        $region29: #{tpu_custom_call.1} parent=27 // pred_check
          %p183 = pneg %p54
        $region30: #{tpu_custom_call.1} parent=27 // pred_check_branch
          %185 = sbr.rel (%p183) target = $region32
        $region31: #{tpu_custom_call.1} parent=27 // pred_region
          %s186 = smul.u32 2, %s22
          %p187 = scmp.lt.s32.totalorder %s21, 1
          %s188 = scalar_select %p187, %s21, 1
          %p189 = scmp.lt.s32.totalorder %s186, 1
          %s190 = scalar_select %p189, %s186, 1
          %s191 = smul.addr %s188, 2
          %s192 = sadd.s32 %s190, %s191
          %s193 = smul.addr %s192, 4
          %s194 = scalar_lea.vmem %s0, %s193
          %s195 = smul.u32 2, %s22
        $region32: #{tpu_custom_call.1} parent=27 // pred_fallthru
          _
      $region28: #{tpu_custom_call.1} parent=5 // pred_fallthru
        _
      %p196 = scmp.le.s32.totalorder 1, %s13
      %p197 = scmp.lt.s32.totalorder %s13, 5
      %p198 = pnand %p196, %p197
      %p199 = pneg %p198
      // Predicated region
      $region33: #{tpu_custom_call.1} parent=5 // pred_check
        _
      $region34: #{tpu_custom_call.1} parent=5 // pred_check_branch
        %201 = sbr.rel (%p198) target = $region36
      $region35: #{tpu_custom_call.1} parent=5 // pred_region
        %s202 = ssub.s32 %s13, 1
        %s203 = smul.u32 2, %s25
        %p204 = scmp.lt.s32.totalorder %s24, 1
        %s205 = scalar_select %p204, %s24, 1
        %p206 = scmp.lt.s32.totalorder %s203, 1
        %s207 = scalar_select %p206, %s203, 1
        %s208 = smul.addr %s205, 2
        %s209 = sadd.s32 %s207, %s208
        %s210 = smul.addr %s209, 4
        %s211 = scalar_lea.vmem %s0, %s210
        %p212 = pneg %p60
        %p213 = pneg %p57
        %p214 = pneg %p81
        %p215 = pneg %p78
        %p216 = pneg %p102
        %p217 = pneg %p99
        %p218 = pneg %p123
        %p219 = pneg %p120
        %p220 = pneg %p155
        %p221 = pneg %p152
        %s222 = sand.u32 %s142, 1
        %s223 = scalar_lea.sflag [#allocation7], %s222
        %s224 = sand.u32 %s142, 1
        %s225 = smul.addr %s224, 16
        %s226 = scalar_lea.vmem [#allocation6], %s225
        %s227 = smul.u32 2, %s25
        %p228 = scmp.lt.s32.totalorder %s24, 1
        %s229 = scalar_select %p228, %s24, 1
        %p230 = scmp.lt.s32.totalorder %s227, 1
        %s231 = scalar_select %p230, %s227, 1
        %s232 = smul.addr %s229, 2
        %s233 = sadd.s32 %s231, %s232
        %s234 = smul.addr %s233, 4
        %s235 = scalar_lea.vmem %s0, %s234
        %s236 = smul.u32 2, %s25
        %s237 = smul.u32 %s24, %s23
        %s238 = smul.u32 %s25, %s23
        %s239 = smul.u32 2, %s238
        %p240 = scmp.eq.s32.totalorder %s23, 0
        %p241 = scmp.eq.s32.totalorder %s24, 0
        %p242 = pnand %p240, %p241
        %p243 = pneg %p242
        %p244 = scmp.eq.s32.totalorder %s25, 0
        %p245 = pnand %p243, %p244
        %p246 = pneg %p245
        // Predicated region
        $region37: #{tpu_custom_call.1} parent=35 // pred_check
          _
        $region38: #{tpu_custom_call.1} parent=35 // pred_check_branch
          %248 = sbr.rel (%p245) target = $region40
        $region39: #{tpu_custom_call.1} parent=35 // pred_region
          %vm249 = vcmask 3072
          %250 = vst.msk [vmem:[#allocation2] sm:$0xf] %vm249, 0.0
          %vm251 = vcmask 27648
          %252 = vst.msk [vmem:[#allocation3] sm:$0xf] %vm251, 0.0
        $region40: #{tpu_custom_call.1} parent=35 // pred_fallthru
          _
        // Predicated region
        $region41: #{tpu_custom_call.1} parent=35 // pred_check
          %p253 = pneg %p240
        $region42: #{tpu_custom_call.1} parent=35 // pred_check_branch
          %255 = sbr.rel (%p253) target = $region44
        $region43: #{tpu_custom_call.1} parent=35 // pred_region
          %v256 = vld [vmem:[%s235] sm:$0xff]
          %v257 = vld [vmem:[#allocation2] sm:$0xf]
          %v259 = vcombine.high %v256, %v256
          %vm261 = vcmask 1043456
          %v262 = vsel %vm261, %v256, 0.0
          %v263 = vsel %vm261, %v259, 0.0
          %v264 = vadd.f32 %v262, %v263
          %265 = vadd.xlane.f32.xlu0 %v264
          %v266 = vpop.xlane.xlu0 %265
          %v267 = vadd.f32 %v257, %v266
          %vm268 = vcmask 3072
          %269 = vst.msk [vmem:[#allocation2] sm:$0xf] %vm268, %v267
          %v270 = vld [vmem:[#allocation3] sm:$0xf]
          %271 = vmatprep.subr.mxu0 %v259
          %272 = vmatpush1.xpose.msra.mxu0 %v256
          %273 = vmatprep.subr.mxu0 0.0
          %274 = vmatpush1.xpose.msra.mxu0 0.0
          %275 = vmatprep.subr.mxu0 0.0
          %276 = vmatpush1.xpose.msra.mxu0 0.0
          %277 = vmatprep.subr.mxu0 0.0
          %278 = vmatpush1.xpose.msra.mxu0 0.0
          %279 = vmatprep.subr.mxu0 0.0
          %280 = vmatpush1.xpose.msra.mxu0 0.0
          %281 = vmatprep.subr.mxu0 0.0
          %282 = vmatpush1.xpose.msra.mxu0 0.0
          %283 = vmatprep.subr.mxu0 0.0
          %284 = vmatpush1.xpose.msra.mxu0 0.0
          %285 = vmatprep.subr.mxu0 0.0
          %286 = vmatpush1.xpose.msra.mxu0 0.0
          %287 = vmatprep.subr.mxu0 0.0
          %288 = vmatpush1.xpose.msra.mxu0 0.0
          %289 = vmatprep.subr.mxu0 0.0
          %290 = vmatpush1.xpose.msra.mxu0 0.0
          %291 = vmatprep.subr.mxu0 0.0
          %292 = vmatpush1.xpose.msra.mxu0 0.0
          %293 = vmatprep.subr.mxu0 0.0
          %294 = vmatpush1.xpose.msra.mxu0 0.0
          %295 = vmatprep.subr.mxu0 0.0
          %296 = vmatpush1.xpose.msra.mxu0 0.0
          %297 = vmatprep.subr.mxu0 0.0
          %298 = vmatpush1.xpose.msra.mxu0 0.0
          %299 = vmatprep.subr.mxu0 0.0
          %300 = vmatpush1.xpose.msra.mxu0 0.0
          %301 = vmatprep.subr.mxu0 0.0
          %302 = vmatpush1.xpose.msra.mxu0 0.0
          %303 = vmatprep.subr.mxu0 0.0
          %304 = vmatpush1.xpose.msra.mxu0 0.0
          %305 = vmatprep.subr.mxu0 0.0
          %306 = vmatpush1.xpose.msra.mxu0 0.0
          %307 = vmatprep.subr.mxu0 0.0
          %308 = vmatpush1.xpose.msra.mxu0 0.0
          %309 = vmatprep.subr.mxu0 0.0
          %310 = vmatpush1.xpose.msra.mxu0 0.0
          %311 = vmatprep.subr.mxu0 0.0
          %312 = vmatpush1.xpose.msra.mxu0 0.0
          %313 = vmatprep.subr.mxu0 0.0
          %314 = vmatpush1.xpose.msra.mxu0 0.0
          %315 = vmatprep.subr.mxu0 0.0
          %316 = vmatpush1.xpose.msra.mxu0 0.0
          %317 = vmatprep.subr.mxu0 0.0
          %318 = vmatpush1.xpose.msra.mxu0 0.0
          %319 = vmatprep.subr.mxu0 0.0
          %320 = vmatpush1.xpose.msra.mxu0 0.0
          %321 = vmatprep.subr.mxu0 0.0
          %322 = vmatpush1.xpose.msra.mxu0 0.0
          %323 = vmatprep.subr.mxu0 0.0
          %324 = vmatpush1.xpose.msra.mxu0 0.0
          %325 = vmatprep.subr.mxu0 0.0
          %326 = vmatpush1.xpose.msra.mxu0 0.0
          %327 = vmatprep.subr.mxu0 0.0
          %328 = vmatpush1.xpose.msra.mxu0 0.0
          %329 = vmatprep.subr.mxu0 0.0
          %330 = vmatpush1.xpose.msra.mxu0 0.0
          %331 = vmatprep.subr.mxu0 0.0
          %332 = vmatpush1.xpose.msra.mxu0 0.0
          %333 = vmatprep.subr.mxu0 0.0
          %334 = vmatpush1.xpose.msra.mxu0 0.0
          %335 = vmatprep.mubr.f32.mxu0 %v259
          %336 = vmatmul.mubr.f32.gmra.mrb[0].mxu0 %v256
          %v337 = vpop.f32.mrb[0].mxu0
          %v338 = vadd.f32 0.0, %v337
          %v339 = vpop.f32.mrb[0].mxu0
          %340 = vdwg.mxu0
          %v341 = vadd.f32 %v270, %v338
          %vm342 = vcmask 27648
          %343 = vst.msk [vmem:[#allocation3] sm:$0xf] %vm342, %v341
        $region44: #{tpu_custom_call.1} parent=35 // pred_fallthru
          _
        %p344 = scmp.eq.s32.totalorder %s23, 1
        // Predicated region
        $region45: #{tpu_custom_call.1} parent=35 // pred_check
          %p345 = pneg %p344
        $region46: #{tpu_custom_call.1} parent=35 // pred_check_branch
          %347 = sbr.rel (%p345) target = $region48
        $region47: #{tpu_custom_call.1} parent=35 // pred_region
          %p348 = pnand %p241, %p244
          %p349 = pneg %p348
          // Predicated region
          $region49: #{tpu_custom_call.1} parent=47 // pred_check
            _
          $region50: #{tpu_custom_call.1} parent=47 // pred_check_branch
            %351 = sbr.rel (%p348) target = $region52
          $region51: #{tpu_custom_call.1} parent=47 // pred_region
            %v352 = vld [vmem:[%s1] sm:$0xff]
            %v353 = vld [vmem:[#allocation2] sm:$0xf]
            %vm354 = vcmask 31744
            %v356 = vsel %vm354, %v352, 0
            %vm358 = vcmask 1043456
            %v360 = vsel %vm358, %v353, 0
            %362 = vmatprep.subr.mxu0 0.0
            %363 = vmatpush1.msra.mxu0 %v360
            %364 = vmatprep.subr.mxu0 0.0
            %365 = vmatpush1.msra.mxu0 0.0
            %366 = vmatprep.subr.mxu0 0.0
            %367 = vmatpush1.msra.mxu0 0.0
            %368 = vmatprep.subr.mxu0 0.0
            %369 = vmatpush1.msra.mxu0 0.0
            %370 = vmatprep.subr.mxu0 0.0
            %371 = vmatpush1.msra.mxu0 0.0
            %372 = vmatprep.subr.mxu0 0.0
            %373 = vmatpush1.msra.mxu0 0.0
            %374 = vmatprep.subr.mxu0 0.0
            %375 = vmatpush1.msra.mxu0 0.0
            %376 = vmatprep.subr.mxu0 0.0
            %377 = vmatpush1.msra.mxu0 0.0
            %378 = vmatprep.subr.mxu0 0.0
            %379 = vmatpush1.msra.mxu0 0.0
            %380 = vmatprep.subr.mxu0 0.0
            %381 = vmatpush1.msra.mxu0 0.0
            %382 = vmatprep.subr.mxu0 0.0
            %383 = vmatpush1.msra.mxu0 0.0
            %384 = vmatprep.subr.mxu0 0.0
            %385 = vmatpush1.msra.mxu0 0.0
            %386 = vmatprep.subr.mxu0 0.0
            %387 = vmatpush1.msra.mxu0 0.0
            %388 = vmatprep.subr.mxu0 0.0
            %389 = vmatpush1.msra.mxu0 0.0
            %390 = vmatprep.subr.mxu0 0.0
            %391 = vmatpush1.msra.mxu0 0.0
            %392 = vmatprep.subr.mxu0 0.0
            %393 = vmatpush1.msra.mxu0 0.0
            %394 = vmatprep.subr.mxu0 0.0
            %395 = vmatpush1.msra.mxu0 0.0
            %396 = vmatprep.subr.mxu0 0.0
            %397 = vmatpush1.msra.mxu0 0.0
            %398 = vmatprep.subr.mxu0 0.0
            %399 = vmatpush1.msra.mxu0 0.0
            %400 = vmatprep.subr.mxu0 0.0
            %401 = vmatpush1.msra.mxu0 0.0
            %402 = vmatprep.subr.mxu0 0.0
            %403 = vmatpush1.msra.mxu0 0.0
            %404 = vmatprep.subr.mxu0 0.0
            %405 = vmatpush1.msra.mxu0 0.0
            %406 = vmatprep.subr.mxu0 0.0
            %407 = vmatpush1.msra.mxu0 0.0
            %408 = vmatprep.subr.mxu0 0.0
            %409 = vmatpush1.msra.mxu0 0.0
            %410 = vmatprep.subr.mxu0 0.0
            %411 = vmatpush1.msra.mxu0 0.0
            %412 = vmatprep.subr.mxu0 0.0
            %413 = vmatpush1.msra.mxu0 0.0
            %414 = vmatprep.subr.mxu0 0.0
            %415 = vmatpush1.msra.mxu0 0.0
            %416 = vmatprep.subr.mxu0 0.0
            %417 = vmatpush1.msra.mxu0 0.0
            %418 = vmatprep.subr.mxu0 0.0
            %419 = vmatpush1.msra.mxu0 0.0
            %420 = vmatprep.subr.mxu0 0.0
            %421 = vmatpush1.msra.mxu0 0.0
            %422 = vmatprep.subr.mxu0 0.0
            %423 = vmatpush1.msra.mxu0 0.0
            %424 = vmatprep.subr.mxu0 0.0
            %425 = vmatpush1.msra.mxu0 0.0
            %426 = vmatprep.mubr.f32.mxu0 0.0
            %427 = vmatmul.mubr.f32.gmra.mrb[0].mxu0 %v356
            %v428 = vpop.f32.mrb[0].mxu0
            %v429 = vadd.f32 0.0, %v428
            %v430 = vpop.f32.mrb[0].mxu0
            %431 = vdwg.mxu0
            %v432 = vmul.f32 %v429, 0.001953125
            %v433 = vld [vmem:[#allocation3] sm:$0xf]
            %v435 = vsel %vm358, %v433, 0
            %437 = vmatprep.subr.mxu0 0.0
            %438 = vmatpush1.msra.mxu0 %v435
            %439 = vmatprep.subr.mxu0 0.0
            %440 = vmatpush1.msra.mxu0 0.0
            %441 = vmatprep.subr.mxu0 0.0
            %442 = vmatpush1.msra.mxu0 0.0
            %443 = vmatprep.subr.mxu0 0.0
            %444 = vmatpush1.msra.mxu0 0.0
            %445 = vmatprep.subr.mxu0 0.0
            %446 = vmatpush1.msra.mxu0 0.0
            %447 = vmatprep.subr.mxu0 0.0
            %448 = vmatpush1.msra.mxu0 0.0
            %449 = vmatprep.subr.mxu0 0.0
            %450 = vmatpush1.msra.mxu0 0.0
            %451 = vmatprep.subr.mxu0 0.0
            %452 = vmatpush1.msra.mxu0 0.0
            %453 = vmatprep.subr.mxu0 0.0
            %454 = vmatpush1.msra.mxu0 0.0
            %455 = vmatprep.subr.mxu0 0.0
            %456 = vmatpush1.msra.mxu0 0.0
            %457 = vmatprep.subr.mxu0 0.0
            %458 = vmatpush1.msra.mxu0 0.0
            %459 = vmatprep.subr.mxu0 0.0
            %460 = vmatpush1.msra.mxu0 0.0
            %461 = vmatprep.subr.mxu0 0.0
            %462 = vmatpush1.msra.mxu0 0.0
            %463 = vmatprep.subr.mxu0 0.0
            %464 = vmatpush1.msra.mxu0 0.0
            %465 = vmatprep.subr.mxu0 0.0
            %466 = vmatpush1.msra.mxu0 0.0
            %467 = vmatprep.subr.mxu0 0.0
            %468 = vmatpush1.msra.mxu0 0.0
            %469 = vmatprep.subr.mxu0 0.0
            %470 = vmatpush1.msra.mxu0 0.0
            %471 = vmatprep.subr.mxu0 0.0
            %472 = vmatpush1.msra.mxu0 0.0
            %473 = vmatprep.subr.mxu0 0.0
            %474 = vmatpush1.msra.mxu0 0.0
            %475 = vmatprep.subr.mxu0 0.0
            %476 = vmatpush1.msra.mxu0 0.0
            %477 = vmatprep.subr.mxu0 0.0
            %478 = vmatpush1.msra.mxu0 0.0
            %479 = vmatprep.subr.mxu0 0.0
            %480 = vmatpush1.msra.mxu0 0.0
            %481 = vmatprep.subr.mxu0 0.0
            %482 = vmatpush1.msra.mxu0 0.0
            %483 = vmatprep.subr.mxu0 0.0
            %484 = vmatpush1.msra.mxu0 0.0
            %485 = vmatprep.subr.mxu0 0.0
            %486 = vmatpush1.msra.mxu0 0.0
            %487 = vmatprep.subr.mxu0 0.0
            %488 = vmatpush1.msra.mxu0 0.0
            %489 = vmatprep.subr.mxu0 0.0
            %490 = vmatpush1.msra.mxu0 0.0
            %491 = vmatprep.subr.mxu0 0.0
            %492 = vmatpush1.msra.mxu0 0.0
            %493 = vmatprep.subr.mxu0 0.0
            %494 = vmatpush1.msra.mxu0 0.0
            %495 = vmatprep.subr.mxu0 0.0
            %496 = vmatpush1.msra.mxu0 0.0
            %497 = vmatprep.subr.mxu0 0.0
            %498 = vmatpush1.msra.mxu0 0.0
            %499 = vmatprep.subr.mxu0 0.0
            %500 = vmatpush1.msra.mxu0 0.0
            %501 = vmatprep.mubr.f32.mxu0 0.0
            %502 = vmatmul.mubr.f32.gmra.mrb[0].mxu0 %v356
            %v503 = vpop.f32.mrb[0].mxu0
            %v504 = vadd.f32 0.0, %v503
            %v505 = vpop.f32.mrb[0].mxu0
            %506 = vdwg.mxu0
            %v507 = vmul.f32 %v504, %v352
            %v508 = vsel %vm354, %v507, 0.0
            %509 = vadd.xlane.f32.xlu0 %v508
            %v510 = vpop.xlane.xlu0 %509
            %v511 = vmul.f32 %v510, 0.001953125
            %v512 = vmul.f32 %v432, %v432
            %v513 = vsub.f32 %v511, %v512
            %v514 = vmax.f32 %v513, 0.0
            %v515 = vld [vmem:[%s2] sm:$0xff]
            %v516 = vadd.f32 %v514, 1e-05
            %v517 = vrsqrt.pop %v516
            %v518 = vmul.f32 %v515, %v517
            %vm519 = vcmask 7168
            %520 = vst.msk [vmem:[#allocation4] sm:$0xff] %vm519, %v518
            %v521 = vld [vmem:[%s3] sm:$0xff]
            %v522 = vmul.f32 %v432, %v518
            %v523 = vsub.f32 %v521, %v522
            %524 = vst.msk [vmem:[#allocation5] sm:$0xff] %vm519, %v523
          $region52: #{tpu_custom_call.1} parent=47 // pred_fallthru
            _
          %v525 = vld [vmem:[%s1] sm:$0xff]
          %v526 = vld [vmem:[%s235] sm:$0xff]
          %v528 = vcombine.high %v526, %v526
          %vm529 = vcmask 31744
          %v531 = vsel %vm529, %v525, 0
          %vm533 = vcmask 1043456
          %v534 = vsel %vm533, %v526, 0
          %v536 = vsel %vm533, %v528, 0
          %538 = vmatprep.subr.mxu0 %v536
          %539 = vmatpush1.msra.mxu0 %v534
          %540 = vmatprep.subr.mxu0 0.0
          %541 = vmatpush1.msra.mxu0 0.0
          %542 = vmatprep.subr.mxu0 0.0
          %543 = vmatpush1.msra.mxu0 0.0
          %544 = vmatprep.subr.mxu0 0.0
          %545 = vmatpush1.msra.mxu0 0.0
          %546 = vmatprep.subr.mxu0 0.0
          %547 = vmatpush1.msra.mxu0 0.0
          %548 = vmatprep.subr.mxu0 0.0
          %549 = vmatpush1.msra.mxu0 0.0
          %550 = vmatprep.subr.mxu0 0.0
          %551 = vmatpush1.msra.mxu0 0.0
          %552 = vmatprep.subr.mxu0 0.0
          %553 = vmatpush1.msra.mxu0 0.0
          %554 = vmatprep.subr.mxu0 0.0
          %555 = vmatpush1.msra.mxu0 0.0
          %556 = vmatprep.subr.mxu0 0.0
          %557 = vmatpush1.msra.mxu0 0.0
          %558 = vmatprep.subr.mxu0 0.0
          %559 = vmatpush1.msra.mxu0 0.0
          %560 = vmatprep.subr.mxu0 0.0
          %561 = vmatpush1.msra.mxu0 0.0
          %562 = vmatprep.subr.mxu0 0.0
          %563 = vmatpush1.msra.mxu0 0.0
          %564 = vmatprep.subr.mxu0 0.0
          %565 = vmatpush1.msra.mxu0 0.0
          %566 = vmatprep.subr.mxu0 0.0
          %567 = vmatpush1.msra.mxu0 0.0
          %568 = vmatprep.subr.mxu0 0.0
          %569 = vmatpush1.msra.mxu0 0.0
          %570 = vmatprep.subr.mxu0 0.0
          %571 = vmatpush1.msra.mxu0 0.0
          %572 = vmatprep.subr.mxu0 0.0
          %573 = vmatpush1.msra.mxu0 0.0
          %574 = vmatprep.subr.mxu0 0.0
          %575 = vmatpush1.msra.mxu0 0.0
          %576 = vmatprep.subr.mxu0 0.0
          %577 = vmatpush1.msra.mxu0 0.0
          %578 = vmatprep.subr.mxu0 0.0
          %579 = vmatpush1.msra.mxu0 0.0
          %580 = vmatprep.subr.mxu0 0.0
          %581 = vmatpush1.msra.mxu0 0.0
          %582 = vmatprep.subr.mxu0 0.0
          %583 = vmatpush1.msra.mxu0 0.0
          %584 = vmatprep.subr.mxu0 0.0
          %585 = vmatpush1.msra.mxu0 0.0
          %586 = vmatprep.subr.mxu0 0.0
          %587 = vmatpush1.msra.mxu0 0.0
          %588 = vmatprep.subr.mxu0 0.0
          %589 = vmatpush1.msra.mxu0 0.0
          %590 = vmatprep.subr.mxu0 0.0
          %591 = vmatpush1.msra.mxu0 0.0
          %592 = vmatprep.subr.mxu0 0.0
          %593 = vmatpush1.msra.mxu0 0.0
          %594 = vmatprep.subr.mxu0 0.0
          %595 = vmatpush1.msra.mxu0 0.0
          %596 = vmatprep.subr.mxu0 0.0
          %597 = vmatpush1.msra.mxu0 0.0
          %598 = vmatprep.subr.mxu0 0.0
          %599 = vmatpush1.msra.mxu0 0.0
          %600 = vmatprep.subr.mxu0 0.0
          %601 = vmatpush1.msra.mxu0 0.0
          %602 = vmatprep.mubr.f32.mxu0 0.0
          %603 = vmatmul.mubr.f32.gmra.mrb[0].mxu0 %v531
          %v604 = vpop.f32.mrb[0].mxu0
          %v605 = vadd.f32 0.0, %v604
          %v606 = vpop.f32.mrb[0].mxu0
          %v607 = vadd.f32 0.0, %v606
          %608 = vdwg.mxu0
          %v609 = vld [vmem:[#allocation4] sm:$0xff]
          %611 = vset.pattern.permute.xlu0 0
          %612 = vperm.xlu0 %611, %v609
          %v613 = vpop.permute.xlu0 %612
          %v615 = vmul.f32 %v605, %v613
          %v616 = vmul.f32 %v607, %v613
          %v617 = vld [vmem:[#allocation5] sm:$0xff]
          %619 = vset.pattern.permute.xlu0 0
          %620 = vperm.xlu0 %619, %v617
          %v621 = vpop.permute.xlu0 %620
          %v623 = vadd.f32 %v615, %v621
          %v624 = vadd.f32 %v616, %v621
          %v625 = vmax.f32 %v623, 0.0
          %v626 = vmax.f32 %v624, 0.0
          %627 = vst [vmem:[%s226] sm:$0xff] %v625
          %628 = vst [vmem:[%s226 + $0x8] sm:$0xff] %v626
        $region48: #{tpu_custom_call.1} parent=35 // pred_fallthru
          _
        %s629 = sand.u32 %s142, 1
        %s630 = scalar_lea.sflag [#allocation7], %s629
        %s631 = sand.u32 %s142, 1
        %s632 = smul.addr %s631, 16
        %s633 = scalar_lea.vmem [#allocation6], %s632
        // Predicated region
        $region53: #{tpu_custom_call.1} parent=35 // pred_check
          %p634 = pneg %p152
        $region54: #{tpu_custom_call.1} parent=35 // pred_check_branch
          %636 = sbr.rel (%p634) target = $region56
        $region55: #{tpu_custom_call.1} parent=35 // pred_region
          %s637 = smul.u32 %s24, %s23
          %s638 = smul.u32 %s25, %s23
          %s639 = smul.u32 2, %s638
          %s641 = ssub.s32 256, 256
          %642 = vsyncadd %s630, %s641
          %s643 = smul.addr %s637, 2
          %s644 = sadd.s32 %s639, %s643
          %s645 = smul.addr %s644, 128
          %s646 = scalar_lea.hbm %s4, %s645
          %s648 = sshll.u32 %s633, 4
          %s649 = int_to_ptr.vmem [resolvable:$true] %s648
          %651 = dma.vmem_to_hbm [thread:$0]  %s649, 256, %s646, %s630
        $region56: #{tpu_custom_call.1} parent=35 // pred_fallthru
          _
      $region36: #{tpu_custom_call.1} parent=5 // pred_fallthru
        _
      %p652 = scmp.le.s32.totalorder 2, %s13
      // Predicated region
      $region57: #{tpu_custom_call.1} parent=5 // pred_check
        %p653 = pneg %p652
      $region58: #{tpu_custom_call.1} parent=5 // pred_check_branch
        %655 = sbr.rel (%p653) target = $region60
      $region59: #{tpu_custom_call.1} parent=5 // pred_region
        %s656 = ssub.s32 %s13, 2
        // Predicated region
        $region61: #{tpu_custom_call.1} parent=59 // pred_check
          %p657 = pneg %p158
        $region62: #{tpu_custom_call.1} parent=59 // pred_check_branch
          %659 = sbr.rel (%p657) target = $region64
        $region63: #{tpu_custom_call.1} parent=59 // pred_region
          %s660 = sand.u32 %s143, 1
          %s661 = scalar_lea.sflag [#allocation7], %s660
          %s662 = sand.u32 %s143, 1
          %s663 = smul.addr %s662, 16
          %s664 = scalar_lea.vmem [#allocation6], %s663
          %665 = dma.done %s661, 256
        $region64: #{tpu_custom_call.1} parent=59 // pred_fallthru
          _
      $region60: #{tpu_custom_call.1} parent=5 // pred_fallthru
        _
    $region6: #{tpu_custom_call.1} parent=1 // loop_footer
      %s17 = sadd.s32 1, %s13
    $region7: #{tpu_custom_call.1} parent=1 // loop_footer_branch
      %12 = sbr.rel target = $region3
    $region8: #{tpu_custom_call.1} parent=1 // loop_exit
      _
    %666 = vsyncpa [#allocation7], 1
    %s667 = scalar_lea.sflag [#allocation7], 1
    %668 = vsyncpa %s667, 1

</llo_original>
